<compile_context>
chip_gen: v7x
topology: tpu7x:2x2x1
jax: 0.10.0
libtpu: 0.0.40
codegen_flags: <defaults>
</compile_context>

<pallas_src>
import jax
import jax.numpy as jnp
from jax import lax
from jax.experimental import pallas as pl
from jax.experimental.pallas import tpu as pltpu

VMEM = pltpu.MemorySpace.VMEM
NEG_INF = -1e30


# --------------------------------------------------------------------------- feature encoder
def _feature_encoder_kernel(x_ref, w1_ref, b1_ref, g_ref, be_ref, w2_ref, b2_ref, o_ref):
    # Linear(7->128) + LayerNorm(128, eps=1e-5) + LeakyReLU(0.1) + Dropout(id) + Linear(128->256)
    x = x_ref[...]
    h = jnp.dot(x, w1_ref[...], preferred_element_type=jnp.float32) + b1_ref[...]
    mu = jnp.mean(h, axis=-1, keepdims=True)
    cen = h - mu
    var = jnp.mean(cen * cen, axis=-1, keepdims=True)
    h = g_ref[...] * (cen * lax.rsqrt(var + 1e-5)) + be_ref[...]
    h = jnp.where(h >= 0, h, 0.1 * h)                    # LeakyReLU(0.1)
    o_ref[...] = (jnp.dot(h, w2_ref[...], preferred_element_type=jnp.float32)
                  + b2_ref[...]).astype(o_ref.dtype)


def feature_encoder(x, w1, b1, gamma, beta, w2, b2, *, tile_n=256):
    n, f_in = x.shape
    h1 = w1.shape[1]
    h2 = w2.shape[1]
    # pad the tiny feature dim (7 -> 8) onto a full sublane
    f_pad = pl.cdiv(f_in, 8) * 8
    if f_pad != f_in:
        x = jnp.pad(x, ((0, 0), (0, f_pad - f_in)))
        w1 = jnp.pad(w1, ((0, f_pad - f_in), (0, 0)))
    # large node tiles (multiple of 8) to amortize the ~0.35us per-grid-step overhead
    tile_n = min(tile_n, pl.cdiv(n, 8) * 8)
    n_pad = pl.cdiv(n, tile_n) * tile_n
    if n_pad != n:
        x = jnp.pad(x, ((0, n_pad - n), (0, 0)))
    out = pl.pallas_call(
        _feature_encoder_kernel,
        out_shape=jax.ShapeDtypeStruct((n_pad, h2), jnp.float32),
        grid=(n_pad // tile_n,),
        in_specs=[
            pl.BlockSpec((tile_n, f_pad), lambda i: (i, 0)),
            pl.BlockSpec((f_pad, h1), lambda i: (0, 0)),
            pl.BlockSpec((1, h1), lambda i: (0, 0)),
            pl.BlockSpec((1, h1), lambda i: (0, 0)),
            pl.BlockSpec((1, h1), lambda i: (0, 0)),
            pl.BlockSpec((h1, h2), lambda i: (0, 0)),
            pl.BlockSpec((1, h2), lambda i: (0, 0)),
        ],
        out_specs=pl.BlockSpec((tile_n, h2), lambda i: (i, 0)),
        compiler_params=pltpu.CompilerParams(dimension_semantics=("parallel",)),
    )(x, w1, b1.reshape(1, -1), gamma.reshape(1, -1), beta.reshape(1, -1),
      w2, b2.reshape(1, -1))
    return out[:n]


# --------------------------------------------------------------------------- fused GAT x3 + Set2Set
def _gat_layer(x, adj_bias, w, att_src_bd, att_dst_bd, bias, *, heads, C, concat):
    # x: (N, F_in); adj_bias: (N, N) additive mask [dst, src]; att_*_bd: (H*C, H) block-diag
    xp = jnp.dot(x, w, preferred_element_type=jnp.float32)                    # (N, H*C)
    a_dst = jnp.dot(xp, att_dst_bd, preferred_element_type=jnp.float32)       # (N, H)
    a_src = lax.dot_general(att_src_bd, xp, (((0,), (1,)), ((), ())),
                            preferred_element_type=jnp.float32)               # (H, N)
    outs = []
    for h in range(heads):
        logit = a_dst[:, h:h + 1] + a_src[h:h + 1, :]                          # (N, N)
        logit = jnp.where(logit >= 0, logit, 0.2 * logit)                      # leaky_relu(0.2)
        masked = logit + adj_bias                                              # additive mask: no selects
        m = jnp.max(masked, axis=-1, keepdims=True)
        e = jnp.exp(masked - m)                                                # masked entries -> exact 0
        alpha = e / jnp.sum(e, axis=-1, keepdims=True)                         # softmax over src per dst
        xh = xp[:, h * C:(h + 1) * C]
        outs.append(jnp.dot(alpha, xh, preferred_element_type=jnp.float32))    # (N, C)
    if concat:
        out = jnp.concatenate(outs, axis=-1)
    else:
        out = outs[0]
        for t in outs[1:]:
            out = out + t
        out = out * (1.0 / heads)
    return out + bias


def _make_graph_kernel(processing_steps, hidden):
    D = hidden

    def kernel(h_ref, adjb_ref,
               w1_ref, s1_ref, d1_ref, b1_ref,
               w2_ref, s2_ref, d2_ref, b2_ref,
               w3_ref, s3_ref, d3_ref, b3_ref,
               wihq_ref, wihr_ref, whh_ref, blstm_ref, membb_ref,
               o_ref):
        adjb = adjb_ref[...].astype(jnp.float32)          # bf16 in HBM, f32 math in-kernel

        # ----- 3 fused GAT layers: features + adjacency stay resident in VMEM -----
        x = _gat_layer(h_ref[...], adjb, w1_ref[...], s1_ref[...], d1_ref[...],
                       b1_ref[...], heads=2, C=D, concat=True)
        x = jnp.where(x >= 0, x, 0.1 * x)                                  # LeakyReLU(0.1)
        x = _gat_layer(x, adjb, w2_ref[...], s2_ref[...], d2_ref[...],
                       b2_ref[...], heads=2, C=D, concat=True)
        x = jnp.where(x >= 0, x, jnp.exp(jnp.minimum(x, 0.0)) - 1.0)       # ELU
        x = _gat_layer(x, adjb, w3_ref[...], s3_ref[...], d3_ref[...],
                       b3_ref[...], heads=1, C=D, concat=False)            # (N, D)

        # ----- Set2Set pooling: 5 unrolled LSTM steps, batch padded to 8 sublanes -----
        xT = jnp.transpose(x)                             # (D, N), transposed ONCE (hoisted)
        membb = membb_ref[...]                            # (Bp, N) additive membership mask
        Bp = membb_ref.shape[0]
        h_l = jnp.zeros((Bp, D), jnp.float32)
        c_l = jnp.zeros((Bp, D), jnp.float32)
        q = jnp.zeros((Bp, D), jnp.float32)
        r = jnp.zeros((Bp, D), jnp.float32)
        for _ in range(processing_steps):
            # q_star @ W_ih expressed as q@Wq + r@Wr (no per-step concatenate)
            gates = (jnp.dot(q, wihq_ref[...], preferred_element_type=jnp.float32)
                     + jnp.dot(r, wihr_ref[...], preferred_element_type=jnp.float32)
                     + jnp.dot(h_l, whh_ref[...], preferred_element_type=jnp.float32)
                     + blstm_ref[...])                    # (Bp, 4D), gate order i,f,g,o
            i_g = jax.nn.sigmoid(gates[:, 0:D])
            f_g = jax.nn.sigmoid(gates[:, D:2 * D])
            g_g = jnp.tanh(gates[:, 2 * D:3 * D])
            o_g = jax.nn.sigmoid(gates[:, 3 * D:4 * D])
            c_l = f_g * c_l + i_g * g_g
            h_l = o_g * jnp.tanh(c_l)
            q = h_l
            scores = jnp.dot(q, xT, preferred_element_type=jnp.float32)    # (Bp, N)
            masked = scores + membb
            m = jnp.max(masked, axis=-1, keepdims=True)
            e = jnp.exp(masked - m)                       # non-member / pad entries stay finite
            a = e / jnp.sum(e, axis=-1, keepdims=True)
            r = jnp.dot(a, x, preferred_element_type=jnp.float32)          # (Bp, D)
        o_ref[...] = jnp.concatenate([q, r], axis=-1).astype(o_ref.dtype)  # (Bp, 2D) lane-dense

    return kernel


def _block_diag_att(att):
    # (H, C) -> (H*C, H) block-diagonal, so all heads' score projections are one 128-wide matmul
    H, C = att.shape
    m = jnp.zeros((H * C, H), jnp.float32)
    for h in range(H):
        m = m.at[h * C:(h + 1) * C, h].set(att[h])
    return m


def gat_set2set(h, adj_bias, params, batch, num_graphs, *, hidden=64, processing_steps=5):
    n = h.shape[0]
    b_pad = max(8, pl.cdiv(num_graphs, 8) * 8)            # pad batch to sublane granularity
    graph_ids = jnp.arange(b_pad, dtype=batch.dtype)
    memb_bias = jnp.where(batch[None, :] == graph_ids[:, None], 0.0, NEG_INF).astype(jnp.float32)

    wih = params["ls_wih"]                                 # (2D, 4D), rows: [q | r]
    wih_q, wih_r = wih[:hidden, :], wih[hidden:, :]
    b_lstm = (params["ls_bih"] + params["ls_bhh"]).reshape(1, -1)

    kernel = _make_graph_kernel(processing_steps, hidden)
    # working-set estimate: bf16 adjacency + ~3 (N,N) f32 temporaries + activations + slack
    est = n * n * 2 + 3 * n * n * 4 + 8 * n * 256 * 4 + (4 << 20)
    vmem_limit = int(min(48 * 1024 * 1024, max(32 * 1024 * 1024, est)))

    out = pl.pallas_call(
        kernel,
        out_shape=jax.ShapeDtypeStruct((b_pad, 2 * hidden), jnp.float32),
        in_specs=[pl.BlockSpec(memory_space=VMEM)] * 19,
        out_specs=pl.BlockSpec(memory_space=VMEM),
        compiler_params=pltpu.CompilerParams(vmem_limit_bytes=vmem_limit),
    )(h, adj_bias,
      params["g1_w"], _block_diag_att(params["g1_as"]), _block_diag_att(params["g1_ad"]),
      params["g1_b"].reshape(1, -1),
      params["g2_w"], _block_diag_att(params["g2_as"]), _block_diag_att(params["g2_ad"]),
      params["g2_b"].reshape(1, -1),
      params["g3_w"], _block_diag_att(params["g3_as"]), _block_diag_att(params["g3_ad"]),
      params["g3_b"].reshape(1, -1),
      wih_q, wih_r, params["ls_whh"], b_lstm, memb_bias)
    return out[:num_graphs]


# --------------------------------------------------------------------------- GRAPH1 forward
def build_adj_bias(edge_index, num_nodes, dtype=jnp.bfloat16):
    # adj[dst, src]=1 for every edge src->dst; remove_self_loops + add_self_loops semantics,
    # then converted to an additive softmax bias (0 where edge, -1e30 otherwise), stored bf16.
    src, dst = edge_index[0], edge_index[1]
    adj = jnp.zeros((num_nodes, num_nodes), jnp.float32).at[dst, src].set(1.0)
    eye = jnp.eye(num_nodes, dtype=jnp.float32)
    adj = adj * (1.0 - eye) + eye
    return jnp.where(adj > 0, 0.0, NEG_INF).astype(dtype)


def graph1_forward(params, x, edge_index, edge_attr, batch, num_graphs):
    del edge_attr  # every NGATConv has edge_dim=None -> lin_edge is None -> edge_attr ignored
    n = x.shape[0]
    adj_bias = build_adj_bias(edge_index, n)
    h = feature_encoder(x, params["fe_w1"], params["fe_b1"], params["fe_g"],
                        params["fe_be"], params["fe_w2"], params["fe_b2"])
    # self.dropout(x): eval-mode identity
    return gat_set2set(h, adj_bias, params, batch, num_graphs,
                       hidden=64, processing_steps=5)


# --------------------------------------------------------------------------- demo / self-check
if __name__ == "__main__":
    N, F_IN, B = 16, 7, 2
    key = jax.random.PRNGKey(0)
    ks = list(jax.random.split(key, 20))

    def winit(k, shape):
        return jax.random.normal(k, shape, dtype=jnp.float32) / jnp.sqrt(jnp.float32(shape[0]))

    x = jax.random.normal(ks[0], (N, F_IN), dtype=jnp.float32)

    # 3 unique within-graph neighbors per node (no self loops): E = 48 edges
    node = jnp.arange(N, dtype=jnp.int32)
    src = jnp.repeat(node, 3)
    offs = jnp.tile(jnp.array([1, 2, 3], dtype=jnp.int32), N)
    dst = (src // 8) * 8 + ((src % 8) + offs) % 8
    edge_index = jnp.stack([src, dst])
    edge_attr = jax.random.normal(ks[1], (src.shape[0], 4), dtype=jnp.float32)   # unused (edge_dim=None)
    batch = jnp.repeat(jnp.arange(B, dtype=jnp.int32), N // B)

    params = {
        "fe_w1": winit(ks[2], (7, 128)),
        "fe_b1": 0.01 * jax.random.normal(ks[3], (128,), dtype=jnp.float32),
        "fe_g": jnp.ones((128,), jnp.float32),
        "fe_be": jnp.zeros((128,), jnp.float32),
        "fe_w2": winit(ks[4], (128, 256)),
        "fe_b2": 0.01 * jax.random.normal(ks[5], (256,), dtype=jnp.float32),
        "g1_w": winit(ks[6], (256, 128)),
        "g1_as": 0.1 * jax.random.normal(ks[7], (2, 64), dtype=jnp.float32),
        "g1_ad": 0.1 * jax.random.normal(ks[8], (2, 64), dtype=jnp.float32),
        "g1_b": jnp.zeros((128,), jnp.float32),
        "g2_w": winit(ks[9], (128, 128)),
        "g2_as": 0.1 * jax.random.normal(ks[10], (2, 64), dtype=jnp.float32),
        "g2_ad": 0.1 * jax.random.normal(ks[11], (2, 64), dtype=jnp.float32),
        "g2_b": jnp.zeros((128,), jnp.float32),
        "g3_w": winit(ks[12], (128, 64)),
        "g3_as": 0.1 * jax.random.normal(ks[13], (1, 64), dtype=jnp.float32),
        "g3_ad": 0.1 * jax.random.normal(ks[14], (1, 64), dtype=jnp.float32),
        "g3_b": jnp.zeros((64,), jnp.float32),
        "ls_wih": winit(ks[15], (128, 256)),
        "ls_whh": winit(ks[16], (64, 256)),
        "ls_bih": 0.01 * jax.random.normal(ks[17], (256,), dtype=jnp.float32),
        "ls_bhh": 0.01 * jax.random.normal(ks[18], (256,), dtype=jnp.float32),
    }

    out = graph1_forward(params, x, edge_index, edge_attr, batch, B)
    jax.block_until_ready(out)

    # ---------------- pure-JAX reference (edge-list / segment-op based) ----------------
    src_sl = jnp.concatenate([src, node])
    dst_sl = jnp.concatenate([dst, node])

    def ref_fe(xx):
        h = xx @ params["fe_w1"] + params["fe_b1"]
        mu = h.mean(-1, keepdims=True)
        v = ((h - mu) ** 2).mean(-1, keepdims=True)
        h = params["fe_g"] * ((h - mu) / jnp.sqrt(v + 1e-5)) + params["fe_be"]
        h = jnp.where(h >= 0, h, 0.1 * h)
        return h @ params["fe_w2"] + params["fe_b2"]

    def ref_gat(h, w, a_s, a_d, bias, heads, C, concat, act):
        xp = (h @ w).reshape(-1, heads, C)
        asr = jnp.sum(xp * a_s[None], axis=-1)
        ads = jnp.sum(xp * a_d[None], axis=-1)
        al = asr[src_sl] + ads[dst_sl]
        al = jnp.where(al >= 0, al, 0.2 * al)
        amax = jax.ops.segment_max(al, dst_sl, num_segments=N)
        ee = jnp.exp(al - amax[dst_sl])
        den = jax.ops.segment_sum(ee, dst_sl, num_segments=N)
        p_e = ee / den[dst_sl]
        msg = p_e[:, :, None] * xp[src_sl]
        out_r = jax.ops.segment_sum(msg, dst_sl, num_segments=N)
        out_r = out_r.reshape(N, heads * C) if concat else jnp.mean(out_r, axis=1)
        out_r = out_r + bias
        if act == "leaky0.1":
            out_r = jnp.where(out_r >= 0, out_r, 0.1 * out_r)
        elif act == "elu":
            out_r = jnp.where(out_r >= 0, out_r, jnp.exp(jnp.minimum(out_r, 0.0)) - 1.0)
        return out_r

    def ref_set2set(h):
        D = h.shape[1]
        hh = jnp.zeros((B, D), jnp.float32)
        cc = jnp.zeros((B, D), jnp.float32)
        q_star = jnp.zeros((B, 2 * D), jnp.float32)
        for _ in range(5):
            gates = (q_star @ params["ls_wih"] + hh @ params["ls_whh"]
                     + params["ls_bih"] + params["ls_bhh"])
            i_g = jax.nn.sigmoid(gates[:, :D])
            f_g = jax.nn.sigmoid(gates[:, D:2 * D])
            g_g = jnp.tanh(gates[:, 2 * D:3 * D])
            o_g = jax.nn.sigmoid(gates[:, 3 * D:])
            cc = f_g * cc + i_g * g_g
            hh = o_g * jnp.tanh(cc)
            q = hh
            e = jnp.sum(h * q[batch], axis=-1)
            emax = jax.ops.segment_max(e, batch, num_segments=B)
            ee = jnp.exp(e - emax[batch])
            a = ee / jax.ops.segment_sum(ee, batch, num_segments=B)[batch]
            r = jax.ops.segment_sum(a[:, None] * h, batch, num_segments=B)
            q_star = jnp.concatenate([q, r], axis=-1)
        return q_star

    hr = ref_fe(x)
    hr = ref_gat(hr, params["g1_w"], params["g1_as"], params["g1_ad"], params["g1_b"],
                 2, 64, True, "leaky0.1")
    hr = ref_gat(hr, params["g2_w"], params["g2_as"], params["g2_ad"], params["g2_b"],
                 2, 64, True, "elu")
    hr = ref_gat(hr, params["g3_w"], params["g3_as"], params["g3_ad"], params["g3_b"],
                 1, 64, False, "none")
    ref = ref_set2set(hr)

    assert out.shape == (B, 128)
    assert jnp.allclose(out, ref, atol=2e-3, rtol=2e-3), float(jnp.max(jnp.abs(out - ref)))
    print("KERNEL_OK")
</pallas_src>

<mosaic_0001>
module attributes {stable_mosaic.version = 11 : i64} {
  func.func @_feature_encoder_kernel(%arg0: i32, %arg1: memref<16x8xf32, #tpu.memory_space<vmem>>, %arg2: memref<8x128xf32, #tpu.memory_space<vmem>>, %arg3: memref<1x128xf32, #tpu.memory_space<vmem>>, %arg4: memref<1x128xf32, #tpu.memory_space<vmem>>, %arg5: memref<1x128xf32, #tpu.memory_space<vmem>>, %arg6: memref<128x256xf32, #tpu.memory_space<vmem>>, %arg7: memref<1x256xf32, #tpu.memory_space<vmem>>, %arg8: memref<16x256xf32, #tpu.memory_space<vmem>>) attributes {dimension_semantics = [#tpu.dimension_semantics<parallel>], iteration_bounds = array<i64: 1>, scalar_prefetch = 0 : i64, scratch_operands = 0 : i64, tpu.core_type = #tpu.core_type<tc>, window_params = [{transform_indices = @transform_0, window_bounds = array<i64: 16, 8>}, {pipeline_mode = #tpu.pipeline_mode<synchronous>, transform_indices = @transform_1, window_bounds = array<i64: 8, 128>}, {pipeline_mode = #tpu.pipeline_mode<synchronous>, transform_indices = @transform_2, window_bounds = array<i64: 1, 128>}, {pipeline_mode = #tpu.pipeline_mode<synchronous>, transform_indices = @transform_3, window_bounds = array<i64: 1, 128>}, {pipeline_mode = #tpu.pipeline_mode<synchronous>, transform_indices = @transform_4, window_bounds = array<i64: 1, 128>}, {pipeline_mode = #tpu.pipeline_mode<synchronous>, transform_indices = @transform_5, window_bounds = array<i64: 128, 256>}, {pipeline_mode = #tpu.pipeline_mode<synchronous>, transform_indices = @transform_6, window_bounds = array<i64: 1, 256>}, {transform_indices = @transform_7, window_bounds = array<i64: 16, 256>}]} {
    %c0 = arith.constant 0 : index
    %c0_0 = arith.constant 0 : index
    %0 = vector.load %arg1[%c0, %c0_0] : memref<16x8xf32, #tpu.memory_space<vmem>>, vector<16x8xf32>
    %c0_1 = arith.constant 0 : index
    %c0_2 = arith.constant 0 : index
    %1 = vector.load %arg2[%c0_1, %c0_2] : memref<8x128xf32, #tpu.memory_space<vmem>>, vector<8x128xf32>
    %cst = arith.constant dense<0.000000e+00> : vector<16x128xf32>
    %2 = tpu.matmul %0, %1, %cst {dimension_numbers = #tpu.dot_dimension_numbers<[1], [0], [0], [1], [0, 0, 1, 1], [], []>} : vector<16x8xf32>, vector<8x128xf32>, vector<16x128xf32> -> vector<16x128xf32>
    %c0_3 = arith.constant 0 : index
    %c0_4 = arith.constant 0 : index
    %3 = vector.load %arg3[%c0_3, %c0_4] : memref<1x128xf32, #tpu.memory_space<vmem>>, vector<1x128xf32>
    %4 = vector.broadcast %3 : vector<1x128xf32> to vector<16x128xf32>
    %5 = arith.addf %2, %4 : vector<16x128xf32>
    %cst_5 = arith.constant dense<0.000000e+00> : vector<16xf32>
    %6 = vector.multi_reduction <add>, %5, %cst_5 [1] : vector<16x128xf32> to vector<16xf32>
    %7 = vector.shape_cast %6 : vector<16xf32> to vector<16x1xf32>
    %cst_6 = arith.constant 1.280000e+02 : f32
    %8 = vector.broadcast %cst_6 : f32 to vector<16x1xf32>
    %9 = arith.divf %7, %8 : vector<16x1xf32>
    %10 = vector.broadcast %9 : vector<16x1xf32> to vector<16x128xf32>
    %11 = arith.subf %5, %10 : vector<16x128xf32>
    %12 = arith.mulf %11, %11 : vector<16x128xf32>
    %cst_7 = arith.constant dense<0.000000e+00> : vector<16xf32>
    %13 = vector.multi_reduction <add>, %12, %cst_7 [1] : vector<16x128xf32> to vector<16xf32>
    %14 = vector.shape_cast %13 : vector<16xf32> to vector<16x1xf32>
    %cst_8 = arith.constant 1.280000e+02 : f32
    %15 = vector.broadcast %cst_8 : f32 to vector<16x1xf32>
    %16 = arith.divf %14, %15 : vector<16x1xf32>
    %c0_9 = arith.constant 0 : index
    %c0_10 = arith.constant 0 : index
    %17 = vector.load %arg4[%c0_9, %c0_10] : memref<1x128xf32, #tpu.memory_space<vmem>>, vector<1x128xf32>
    %cst_11 = arith.constant 9.99999974E-6 : f32
    %18 = vector.broadcast %cst_11 : f32 to vector<16x1xf32>
    %19 = arith.addf %16, %18 : vector<16x1xf32>
    %20 = math.rsqrt %19 : vector<16x1xf32>
    %21 = vector.broadcast %20 : vector<16x1xf32> to vector<16x128xf32>
    %22 = arith.mulf %11, %21 : vector<16x128xf32>
    %23 = vector.broadcast %17 : vector<1x128xf32> to vector<16x128xf32>
    %24 = arith.mulf %23, %22 : vector<16x128xf32>
    %c0_12 = arith.constant 0 : index
    %c0_13 = arith.constant 0 : index
    %25 = vector.load %arg5[%c0_12, %c0_13] : memref<1x128xf32, #tpu.memory_space<vmem>>, vector<1x128xf32>
    %26 = vector.broadcast %25 : vector<1x128xf32> to vector<16x128xf32>
    %27 = arith.addf %24, %26 : vector<16x128xf32>
    %cst_14 = arith.constant 0.000000e+00 : f32
    %28 = vector.broadcast %cst_14 : f32 to vector<16x128xf32>
    %29 = arith.cmpf oge, %27, %28 : vector<16x128xf32>
    %cst_15 = arith.constant 1.000000e-01 : f32
    %30 = vector.broadcast %cst_15 : f32 to vector<16x128xf32>
    %31 = arith.mulf %30, %27 : vector<16x128xf32>
    %32 = arith.select %29, %27, %31 : vector<16x128xi1>, vector<16x128xf32>
    %c0_16 = arith.constant 0 : index
    %c0_17 = arith.constant 0 : index
    %33 = vector.load %arg6[%c0_16, %c0_17] : memref<128x256xf32, #tpu.memory_space<vmem>>, vector<128x256xf32>
    %cst_18 = arith.constant dense<0.000000e+00> : vector<16x256xf32>
    %34 = tpu.matmul %32, %33, %cst_18 {dimension_numbers = #tpu.dot_dimension_numbers<[1], [0], [0], [1], [0, 0, 1, 1], [], []>} : vector<16x128xf32>, vector<128x256xf32>, vector<16x256xf32> -> vector<16x256xf32>
    %c0_19 = arith.constant 0 : index
    %c0_20 = arith.constant 0 : index
    %35 = vector.load %arg7[%c0_19, %c0_20] : memref<1x256xf32, #tpu.memory_space<vmem>>, vector<1x256xf32>
    %36 = vector.broadcast %35 : vector<1x256xf32> to vector<16x256xf32>
    %37 = arith.addf %34, %36 : vector<16x256xf32>
    %c0_21 = arith.constant 0 : index
    %c0_22 = arith.constant 0 : index
    %38 = vector.load %arg8[%c0_21, %c0_22] : memref<16x256xf32, #tpu.memory_space<vmem>>, vector<16x256xf32>
    tpu.vector_store %arg8[%c0_21, %c0_22], %37 {strides = array<i32>} : memref<16x256xf32, #tpu.memory_space<vmem>>, vector<16x256xf32>,
    return
  }
  func.func @transform_0(%arg0: i32) -> (i32, i32) {
    %c0_i32 = arith.constant 0 : i32
    %c0_i32_0 = arith.constant 0 : i32
    return %arg0, %c0_i32 : i32, i32
  }
  func.func @transform_1(%arg0: i32) -> (i32, i32) {
    %c0_i32 = arith.constant 0 : i32
    %c0_i32_0 = arith.constant 0 : i32
    %c0_i32_1 = arith.constant 0 : i32
    return %c0_i32, %c0_i32_0 : i32, i32
  }
  func.func @transform_2(%arg0: i32) -> (i32, i32) {
    %c0_i32 = arith.constant 0 : i32
    %c0_i32_0 = arith.constant 0 : i32
    %c0_i32_1 = arith.constant 0 : i32
    return %c0_i32, %c0_i32_0 : i32, i32
  }
  func.func @transform_3(%arg0: i32) -> (i32, i32) {
    %c0_i32 = arith.constant 0 : i32
    %c0_i32_0 = arith.constant 0 : i32
    %c0_i32_1 = arith.constant 0 : i32
    return %c0_i32, %c0_i32_0 : i32, i32
  }
  func.func @transform_4(%arg0: i32) -> (i32, i32) {
    %c0_i32 = arith.constant 0 : i32
    %c0_i32_0 = arith.constant 0 : i32
    %c0_i32_1 = arith.constant 0 : i32
    return %c0_i32, %c0_i32_0 : i32, i32
  }
  func.func @transform_5(%arg0: i32) -> (i32, i32) {
    %c0_i32 = arith.constant 0 : i32
    %c0_i32_0 = arith.constant 0 : i32
    %c0_i32_1 = arith.constant 0 : i32
    return %c0_i32, %c0_i32_0 : i32, i32
  }
  func.func @transform_6(%arg0: i32) -> (i32, i32) {
    %c0_i32 = arith.constant 0 : i32
    %c0_i32_0 = arith.constant 0 : i32
    %c0_i32_1 = arith.constant 0 : i32
    return %c0_i32, %c0_i32_0 : i32, i32
  }
  func.func @transform_7(%arg0: i32) -> (i32, i32) {
    %c0_i32 = arith.constant 0 : i32
    %c0_i32_0 = arith.constant 0 : i32
    return %arg0, %c0_i32 : i32, i32
  }
}

</mosaic_0001>

<llo_original>
// kernel: tpu_custom_call.1
$region0: #{tpu_custom_call.1}
  #allocation0 [shape = 'u32[]', space=smem, size = 0x4, offset = 0x4, fixed_abs, tag = 'smem constant byte address 0x4 - core index']
  #allocation1 [shape = 'u32[144,128]{1,0:T(1,128)}', space=vmem, size = 0x12000, scoped, tag = 'internal scratch']
  %s0 = inlined_call_operand.vmem [shape: f32[16,8], index: 0, kind: input, shape index: {}]
  %s1 = inlined_call_operand.vmem [shape: f32[8,128], index: 1, kind: input, shape index: {}]
  %s2 = inlined_call_operand.vmem [shape: f32[1,128], index: 2, kind: input, shape index: {}]
  %s3 = inlined_call_operand.vmem [shape: f32[1,128], index: 3, kind: input, shape index: {}]
  %s4 = inlined_call_operand.vmem [shape: f32[1,128], index: 4, kind: input, shape index: {}]
  %s5 = inlined_call_operand.hbm [shape: f32[128,256], index: 5, kind: input, shape index: {}]
  %s6 = inlined_call_operand.vmem [shape: f32[1,256], index: 6, kind: input, shape index: {}]
  %s7 = inlined_call_operand.hbm [shape: f32[16,256], index: 7, kind: output, shape index: {}]
  %s8 = sld [smem:[#allocation0]]
  $region42: #{tpu_custom_call.1} parent=0
    _
  %s10 = ssub.s32 1, %s8
  %s11 = scalar_select 0, %s10, %s8
  $region1: #{tpu_custom_call.1} parent=0
    #allocation2 [shape = 'u8[131072]{0}', space=vmem, size = 0x20000, scoped, tag = 'input window, operand 5, single buffered']
    #allocation3 [shape = 's32[1]{0}', space=sflag, size = 0x4, scoped, tag = 'scoped memory for tpu_custom_call.1']
    #allocation4 [shape = 's32[1]{0}', space=sflag, size = 0x4, scoped, tag = 'scoped memory for tpu_custom_call.1']
    #allocation5 [shape = 'u8[16384]{0}', space=vmem, size = 0x4000, scoped, tag = 'output window, operand 0, single buffered']
    %12 = vsyncpa [#allocation3], 0
    %13 = vsyncpa [#allocation4], 0
    // Predicated region
    $region2: #{tpu_custom_call.1} parent=1 // pred_check
      _
    $region3: #{tpu_custom_call.1} parent=1 // pred_check_branch
      %15 = sbr.rel (0) target = $region5
    $region4: #{tpu_custom_call.1} parent=1 // pred_region
      _
    $region5: #{tpu_custom_call.1} parent=1 // pred_fallthru
      _
    // Predicated region
    $region6: #{tpu_custom_call.1} parent=1 // pred_check
      _
    $region7: #{tpu_custom_call.1} parent=1 // pred_check_branch
      %17 = sbr.rel (0) target = $region9
    $region8: #{tpu_custom_call.1} parent=1 // pred_region
      _
    $region9: #{tpu_custom_call.1} parent=1 // pred_fallthru
      _
    // Predicated region
    $region10: #{tpu_custom_call.1} parent=1 // pred_check
      _
    $region11: #{tpu_custom_call.1} parent=1 // pred_check_branch
      %19 = sbr.rel (0) target = $region13
    $region12: #{tpu_custom_call.1} parent=1 // pred_region
      _
    $region13: #{tpu_custom_call.1} parent=1 // pred_fallthru
      _
    // Predicated region
    $region14: #{tpu_custom_call.1} parent=1 // pred_check
      _
    $region15: #{tpu_custom_call.1} parent=1 // pred_check_branch
      %21 = sbr.rel (0) target = $region17
    $region16: #{tpu_custom_call.1} parent=1 // pred_region
      _
    $region17: #{tpu_custom_call.1} parent=1 // pred_fallthru
      _
    // Predicated region
    $region18: #{tpu_custom_call.1} parent=1 // pred_check
      _
    $region19: #{tpu_custom_call.1} parent=1 // pred_check_branch
      %23 = sbr.rel (0) target = $region21
    $region20: #{tpu_custom_call.1} parent=1 // pred_region
      _
    $region21: #{tpu_custom_call.1} parent=1 // pred_fallthru
      _
    // Predicated region
    $region22: #{tpu_custom_call.1} parent=1 // pred_check
      _
    $region23: #{tpu_custom_call.1} parent=1 // pred_check_branch
      %25 = sbr.rel (0) target = $region25
    $region24: #{tpu_custom_call.1} parent=1 // pred_region
      %s27 = ssub.s32 4096, 4096
      %28 = vsyncadd [#allocation3], %s27
      %s29 = sshll.u32 [#allocation2], 4
      %s30 = int_to_ptr.vmem [resolvable:$true] %s29
      %35 = dma.hbm_to_vmem [thread:$0]  %s5, 4096, %s30, [#allocation3], 256, 256, 16
    $region25: #{tpu_custom_call.1} parent=1 // pred_fallthru
      _
    // Predicated region
    $region26: #{tpu_custom_call.1} parent=1 // pred_check
      _
    $region27: #{tpu_custom_call.1} parent=1 // pred_check_branch
      %37 = sbr.rel (0) target = $region29
    $region28: #{tpu_custom_call.1} parent=1 // pred_region
      _
    $region29: #{tpu_custom_call.1} parent=1 // pred_fallthru
      _
    // Predicated region
    $region30: #{tpu_custom_call.1} parent=1 // pred_check
      _
    $region31: #{tpu_custom_call.1} parent=1 // pred_check_branch
      %39 = sbr.rel (0) target = $region33
    $region32: #{tpu_custom_call.1} parent=1 // pred_region
      %40 = dma.done [#allocation3], 4096
    $region33: #{tpu_custom_call.1} parent=1 // pred_fallthru
      _
    %v41 = vld [vmem:[%s0] sm:$0xff]
    %v42 = vld [vmem:[%s0 + $0x8] sm:$0xff]
    %v43 = vld [vmem:[%s1] sm:$0xff]
    %v44 = vld [vmem:[%s2] sm:$0x1]
    %v46 = vlaneseq
    %v47 = vshrl.u32 %v46, 7
    %v48 = vsub.s32 0, %v47
    %v49 = vrot.slane %v44, %v48
    %vm51 = vcmask 64512
    %v53 = vsel %vm51, %v41, 0
    %v56 = vsel %vm51, %v42, 0
    %58 = vmatprep.subr.mxu0 0.0
    %59 = vmatpush1.msra.mxu0 %v43
    %60 = vmatprep.subr.mxu0 0.0
    %61 = vmatpush1.msra.mxu0 0.0
    %62 = vmatprep.subr.mxu0 0.0
    %63 = vmatpush1.msra.mxu0 0.0
    %64 = vmatprep.subr.mxu0 0.0
    %65 = vmatpush1.msra.mxu0 0.0
    %66 = vmatprep.subr.mxu0 0.0
    %67 = vmatpush1.msra.mxu0 0.0
    %68 = vmatprep.subr.mxu0 0.0
    %69 = vmatpush1.msra.mxu0 0.0
    %70 = vmatprep.subr.mxu0 0.0
    %71 = vmatpush1.msra.mxu0 0.0
    %72 = vmatprep.subr.mxu0 0.0
    %73 = vmatpush1.msra.mxu0 0.0
    %74 = vmatprep.subr.mxu0 0.0
    %75 = vmatpush1.msra.mxu0 0.0
    %76 = vmatprep.subr.mxu0 0.0
    %77 = vmatpush1.msra.mxu0 0.0
    %78 = vmatprep.subr.mxu0 0.0
    %79 = vmatpush1.msra.mxu0 0.0
    %80 = vmatprep.subr.mxu0 0.0
    %81 = vmatpush1.msra.mxu0 0.0
    %82 = vmatprep.subr.mxu0 0.0
    %83 = vmatpush1.msra.mxu0 0.0
    %84 = vmatprep.subr.mxu0 0.0
    %85 = vmatpush1.msra.mxu0 0.0
    %86 = vmatprep.subr.mxu0 0.0
    %87 = vmatpush1.msra.mxu0 0.0
    %88 = vmatprep.subr.mxu0 0.0
    %89 = vmatpush1.msra.mxu0 0.0
    %90 = vmatprep.subr.mxu0 0.0
    %91 = vmatpush1.msra.mxu0 0.0
    %92 = vmatprep.subr.mxu0 0.0
    %93 = vmatpush1.msra.mxu0 0.0
    %94 = vmatprep.subr.mxu0 0.0
    %95 = vmatpush1.msra.mxu0 0.0
    %96 = vmatprep.subr.mxu0 0.0
    %97 = vmatpush1.msra.mxu0 0.0
    %98 = vmatprep.subr.mxu0 0.0
    %99 = vmatpush1.msra.mxu0 0.0
    %100 = vmatprep.subr.mxu0 0.0
    %101 = vmatpush1.msra.mxu0 0.0
    %102 = vmatprep.subr.mxu0 0.0
    %103 = vmatpush1.msra.mxu0 0.0
    %104 = vmatprep.subr.mxu0 0.0
    %105 = vmatpush1.msra.mxu0 0.0
    %106 = vmatprep.subr.mxu0 0.0
    %107 = vmatpush1.msra.mxu0 0.0
    %108 = vmatprep.subr.mxu0 0.0
    %109 = vmatpush1.msra.mxu0 0.0
    %110 = vmatprep.subr.mxu0 0.0
    %111 = vmatpush1.msra.mxu0 0.0
    %112 = vmatprep.subr.mxu0 0.0
    %113 = vmatpush1.msra.mxu0 0.0
    %114 = vmatprep.subr.mxu0 0.0
    %115 = vmatpush1.msra.mxu0 0.0
    %116 = vmatprep.subr.mxu0 0.0
    %117 = vmatpush1.msra.mxu0 0.0
    %118 = vmatprep.subr.mxu0 0.0
    %119 = vmatpush1.msra.mxu0 0.0
    %120 = vmatprep.subr.mxu0 0.0
    %121 = vmatpush1.msra.mxu0 0.0
    %122 = vmatprep.mubr.f32.mxu0 0.0
    %123 = vmatmul.mubr.f32.gmra.mrb[0].mxu0 %v53
    %v124 = vpop.f32.mrb[0].mxu0
    %v125 = vadd.f32 %v49, %v124
    %v126 = vpop.f32.mrb[0].mxu0
    %127 = vmatprep.mubr.f32.mxu0 0.0
    %128 = vmatmul.mubr.f32.gmra.mrb[0].mxu0 %v56
    %v129 = vpop.f32.mrb[0].mxu0
    %v130 = vadd.f32 %v49, %v129
    %v131 = vpop.f32.mrb[0].mxu0
    %132 = vdwg.mxu0
    %133 = vadd.xlane.f32.xlu0 %v125
    %v134 = vpop.xlane.xlu0 %133
    %135 = vadd.xlane.f32.xlu0 %v130
    %v136 = vpop.xlane.xlu0 %135
    %v137 = vrcp.pop 128.0
    %v138 = vmul.f32 %v134, %v137
    %v139 = vmul.f32 %v136, %v137
    %v140 = vsub.f32 %v125, %v138
    %v141 = vsub.f32 %v130, %v139
    %v142 = vmul.f32 %v140, %v140
    %v143 = vmul.f32 %v141, %v141
    %144 = vadd.xlane.f32.xlu0 %v142
    %v145 = vpop.xlane.xlu0 %144
    %146 = vadd.xlane.f32.xlu0 %v143
    %v147 = vpop.xlane.xlu0 %146
    %v148 = vmul.f32 %v145, %v137
    %v149 = vmul.f32 %v147, %v137
    %v150 = vld [vmem:[%s3] sm:$0x1]
    %v151 = vadd.f32 %v148, 1e-05
    %v152 = vadd.f32 %v149, 1e-05
    %v153 = vrsqrt.pop %v151
    %v154 = vrsqrt.pop %v152
    %v155 = vmul.f32 %v140, %v153
    %v156 = vmul.f32 %v141, %v154
    %v158 = vlaneseq
    %v159 = vshrl.u32 %v158, 7
    %v160 = vsub.s32 0, %v159
    %v161 = vrot.slane %v150, %v160
    %v163 = vmul.f32 %v161, %v155
    %v164 = vmul.f32 %v161, %v156
    %v165 = vld [vmem:[%s4] sm:$0x1]
    %v167 = vlaneseq
    %v168 = vshrl.u32 %v167, 7
    %v169 = vsub.s32 0, %v168
    %v170 = vrot.slane %v165, %v169
    %v172 = vadd.f32 %v163, %v170
    %v173 = vadd.f32 %v164, %v170
    %vm174 = vcmp.ge.f32.partialorder %v172, 0.0
    %vm175 = vcmp.ge.f32.partialorder %v173, 0.0
    %v176 = vmul.f32 %v172, 0.1
    %v177 = vmul.f32 %v173, 0.1
    %v178 = vsel %vm174, %v172, %v176
    %v179 = vsel %vm175, %v173, %v177
    %v180 = vld [vmem:[#allocation2] sm:$0xff]
    %v181 = vld [vmem:[#allocation2 + $0x8] sm:$0xff]
    %v182 = vld [vmem:[#allocation2 + $0x10] sm:$0xff]
    %v183 = vld [vmem:[#allocation2 + $0x18] sm:$0xff]
    %v184 = vld [vmem:[#allocation2 + $0x20] sm:$0xff]
    %v185 = vld [vmem:[#allocation2 + $0x28] sm:$0xff]
    %v186 = vld [vmem:[#allocation2 + $0x30] sm:$0xff]
    %v187 = vld [vmem:[#allocation2 + $0x38] sm:$0xff]
    %v188 = vld [vmem:[#allocation2 + $0x40] sm:$0xff]
    %v189 = vld [vmem:[#allocation2 + $0x48] sm:$0xff]
    %v190 = vld [vmem:[#allocation2 + $0x50] sm:$0xff]
    %v191 = vld [vmem:[#allocation2 + $0x58] sm:$0xff]
    %v192 = vld [vmem:[#allocation2 + $0x60] sm:$0xff]
    %v193 = vld [vmem:[#allocation2 + $0x68] sm:$0xff]
    %v194 = vld [vmem:[#allocation2 + $0x70] sm:$0xff]
    %v195 = vld [vmem:[#allocation2 + $0x78] sm:$0xff]
    %v196 = vld [vmem:[#allocation2 + $0x80] sm:$0xff]
    %v197 = vld [vmem:[#allocation2 + $0x88] sm:$0xff]
    %v198 = vld [vmem:[#allocation2 + $0x90] sm:$0xff]
    %v199 = vld [vmem:[#allocation2 + $0x98] sm:$0xff]
    %v200 = vld [vmem:[#allocation2 + $0xa0] sm:$0xff]
    %v201 = vld [vmem:[#allocation2 + $0xa8] sm:$0xff]
    %v202 = vld [vmem:[#allocation2 + $0xb0] sm:$0xff]
    %v203 = vld [vmem:[#allocation2 + $0xb8] sm:$0xff]
    %v204 = vld [vmem:[#allocation2 + $0xc0] sm:$0xff]
    %v205 = vld [vmem:[#allocation2 + $0xc8] sm:$0xff]
    %v206 = vld [vmem:[#allocation2 + $0xd0] sm:$0xff]
    %v207 = vld [vmem:[#allocation2 + $0xd8] sm:$0xff]
    %v208 = vld [vmem:[#allocation2 + $0xe0] sm:$0xff]
    %v209 = vld [vmem:[#allocation2 + $0xe8] sm:$0xff]
    %v210 = vld [vmem:[#allocation2 + $0xf0] sm:$0xff]
    %v211 = vld [vmem:[#allocation2 + $0xf8] sm:$0xff]
    %v212 = vld [vmem:[%s6] sm:$0x3]
    %v214 = vlaneseq
    %v215 = vshrl.u32 %v214, 7
    %v216 = vsub.s32 0, %v215
    %v217 = vrot.slane %v212, %v216
    %v218 = vlaneseq
    %v219 = vshrl.u32 %v218, 7
    %v220 = vsub.s32 1, %v219
    %v221 = vrot.slane %v212, %v220
    %224 = vmatprep.subr.mxu0 %v181
    %225 = vmatpush1.msra.mxu0 %v180
    %226 = vmatprep.subr.mxu0 %v183
    %227 = vmatpush1.msra.mxu0 %v182
    %228 = vmatprep.subr.mxu0 %v185
    %229 = vmatpush1.msra.mxu0 %v184
    %230 = vmatprep.subr.mxu0 %v187
    %231 = vmatpush1.msra.mxu0 %v186
    %232 = vmatprep.subr.mxu0 %v189
    %233 = vmatpush1.msra.mxu0 %v188
    %234 = vmatprep.subr.mxu0 %v191
    %235 = vmatpush1.msra.mxu0 %v190
    %236 = vmatprep.subr.mxu0 %v193
    %237 = vmatpush1.msra.mxu0 %v192
    %238 = vmatprep.subr.mxu0 %v195
    %239 = vmatpush1.msra.mxu0 %v194
    %240 = vmatprep.subr.mxu0 %v197
    %241 = vmatpush1.msra.mxu0 %v196
    %242 = vmatprep.subr.mxu0 %v199
    %243 = vmatpush1.msra.mxu0 %v198
    %244 = vmatprep.subr.mxu0 %v201
    %245 = vmatpush1.msra.mxu0 %v200
    %246 = vmatprep.subr.mxu0 %v203
    %247 = vmatpush1.msra.mxu0 %v202
    %248 = vmatprep.subr.mxu0 %v205
    %249 = vmatpush1.msra.mxu0 %v204
    %250 = vmatprep.subr.mxu0 %v207
    %251 = vmatpush1.msra.mxu0 %v206
    %252 = vmatprep.subr.mxu0 %v209
    %253 = vmatpush1.msra.mxu0 %v208
    %254 = vmatprep.subr.mxu0 %v211
    %255 = vmatpush1.msra.mxu0 %v210
    %256 = vmatprep.subr.mxu0 0.0
    %257 = vmatpush1.msra.mxu0 0.0
    %258 = vmatprep.subr.mxu0 0.0
    %259 = vmatpush1.msra.mxu0 0.0
    %260 = vmatprep.subr.mxu0 0.0
    %261 = vmatpush1.msra.mxu0 0.0
    %262 = vmatprep.subr.mxu0 0.0
    %263 = vmatpush1.msra.mxu0 0.0
    %264 = vmatprep.subr.mxu0 0.0
    %265 = vmatpush1.msra.mxu0 0.0
    %266 = vmatprep.subr.mxu0 0.0
    %267 = vmatpush1.msra.mxu0 0.0
    %268 = vmatprep.subr.mxu0 0.0
    %269 = vmatpush1.msra.mxu0 0.0
    %270 = vmatprep.subr.mxu0 0.0
    %271 = vmatpush1.msra.mxu0 0.0
    %272 = vmatprep.subr.mxu0 0.0
    %273 = vmatpush1.msra.mxu0 0.0
    %274 = vmatprep.subr.mxu0 0.0
    %275 = vmatpush1.msra.mxu0 0.0
    %276 = vmatprep.subr.mxu0 0.0
    %277 = vmatpush1.msra.mxu0 0.0
    %278 = vmatprep.subr.mxu0 0.0
    %279 = vmatpush1.msra.mxu0 0.0
    %280 = vmatprep.subr.mxu0 0.0
    %281 = vmatpush1.msra.mxu0 0.0
    %282 = vmatprep.subr.mxu0 0.0
    %283 = vmatpush1.msra.mxu0 0.0
    %284 = vmatprep.subr.mxu0 0.0
    %285 = vmatpush1.msra.mxu0 0.0
    %286 = vmatprep.subr.mxu0 0.0
    %287 = vmatpush1.msra.mxu0 0.0
    %288 = vmatprep.mubr.f32.mxu0 0.0
    %289 = vmatmul.mubr.f32.gmra.mrb[0].mxu0 %v178
    %v290 = vpop.f32.mrb[0].mxu0
    %v291 = vadd.f32 %v217, %v290
    %v292 = vpop.f32.mrb[0].mxu0
    %v293 = vadd.f32 %v221, %v292
    %294 = vmatprep.mubr.f32.mxu0 0.0
    %295 = vmatmul.mubr.f32.gmra.mrb[0].mxu0 %v179
    %v296 = vpop.f32.mrb[0].mxu0
    %v297 = vadd.f32 %v217, %v296
    %v298 = vpop.f32.mrb[0].mxu0
    %v299 = vadd.f32 %v221, %v298
    %300 = vdwg.mxu0
    %301 = vst [vmem:[#allocation5] sm:$0xff] %v291
    %302 = vst [vmem:[#allocation5 + $0x8] sm:$0xff] %v293
    %303 = vst [vmem:[#allocation5 + $0x10] sm:$0xff] %v297
    %304 = vst [vmem:[#allocation5 + $0x18] sm:$0xff] %v299
    // Predicated region
    $region34: #{tpu_custom_call.1} parent=1 // pred_check
      _
    $region35: #{tpu_custom_call.1} parent=1 // pred_check_branch
      %306 = sbr.rel (0) target = $region37
    $region36: #{tpu_custom_call.1} parent=1 // pred_region
      %s308 = ssub.s32 512, 512
      %309 = vsyncadd [#allocation4], %s308
      %s310 = sshll.u32 [#allocation5], 4
      %s311 = int_to_ptr.vmem [resolvable:$true] %s310
      %316 = dma.vmem_to_hbm [thread:$0]  %s311, 512, %s7, [#allocation4], 256, 256, 16
    $region37: #{tpu_custom_call.1} parent=1 // pred_fallthru
      _
    // Predicated region
    $region38: #{tpu_custom_call.1} parent=1 // pred_check
      _
    $region39: #{tpu_custom_call.1} parent=1 // pred_check_branch
      %318 = sbr.rel (0) target = $region41
    $region40: #{tpu_custom_call.1} parent=1 // pred_region
      %319 = dma.done [#allocation4], 512
    $region41: #{tpu_custom_call.1} parent=1 // pred_fallthru
      _
    %320 = vsyncpa [#allocation3], 1
    %321 = vsyncpa [#allocation4], 1

</llo_original>
